<compile_context>
chip_gen: v5e
topology: v5e:2x2
jax: 0.10.0
libtpu: 0.0.40
codegen_flags: <defaults>
</compile_context>

<pallas_src>
import jax
import jax.numpy as jnp
from jax.experimental import pallas as pl
from jax.experimental.pallas import tpu as pltpu


def _round_up(n, m):
    return ((n + m - 1) // m) * m


def _mlp_kernel(x_ref, w1_ref, b1_ref, w2_ref, b2_ref, out_ref):
    """One batch tile of: ReLU(x @ W1 + b1) @ W2 + b2 (lane dims padded to 128)."""
    x = x_ref[...].astype(jnp.bfloat16)                                # f32 streamed; cast on VPU
    h = jnp.dot(x, w1_ref[...], preferred_element_type=jnp.float32)   # (TB, Hp) f32 accum on MXU
    h = jnp.maximum(h + b1_ref[...], 0.0)                              # f32 bias/ReLU (v5e-safe)
    h = h.astype(w2_ref.dtype)                                         # bf16 for second MXU pass
    out = jnp.dot(h, w2_ref[...], preferred_element_type=jnp.float32)  # (TB, Np) f32
    out_ref[...] = out + b2_ref[...]                                   # lane-dense f32 store


def init_params(key, h=64, w=64, num_classes=6):
    """PyTorch-layout params: W (out, in), b (out,), U(-1/sqrt(fan_in), ...)."""
    input_size = 3 * h * w
    mid = 2 * w
    dims = [(input_size, mid), (mid, num_classes)]
    params = []
    for fan_in, fan_out in dims:
        key, kw, kb = jax.random.split(key, 3)
        bound = 1.0 / float(fan_in) ** 0.5
        W = jax.random.uniform(kw, (fan_out, fan_in), jnp.float32, -bound, bound)
        b = jax.random.uniform(kb, (fan_out,), jnp.float32, -bound, bound)
        params.append((W, b))
    return params


def prepare_params(params):
    """One-time glue: transpose to (in, out), zero-pad lane dims to 128, cast
    weights to bf16 (biases stay f32).  Keep this off the per-call hot path."""
    (W1, b1), (W2, b2) = params
    k, hid, nc = W1.shape[1], W1.shape[0], W2.shape[0]
    k_p = _round_up(k, 128)
    hid_p = _round_up(hid, 128)
    nc_p = _round_up(nc, 128)

    w1 = jnp.zeros((k_p, hid_p), jnp.bfloat16).at[:k, :hid].set(W1.T.astype(jnp.bfloat16))
    w2 = jnp.zeros((hid_p, nc_p), jnp.bfloat16).at[:hid, :nc].set(W2.T.astype(jnp.bfloat16))
    bb1 = jnp.zeros((1, hid_p), jnp.float32).at[:, :hid].set(b1.astype(jnp.float32))
    bb2 = jnp.zeros((1, nc_p), jnp.float32).at[:, :nc].set(b2.astype(jnp.float32))
    return {"w1": w1, "b1": bb1, "w2": w2, "b2": bb2,
            "input_size": k, "num_classes": nc}


def _vmem_capacity_bytes():
    """Per-core VMEM capacity; fall back to the smallest (v7x per-TC = 64 MiB)."""
    try:
        return int(pltpu.get_tpu_info().vmem_capacity_bytes)
    except Exception:
        return 64 << 20


def _choose_batch_tile(batch, k_cols, bytes_per_elem, x_budget_bytes):
    """Pick TB:
      * small batches: one tile of round_up(b, 8) rows (no waste),
      * otherwise the largest of {512, 256, 128} whose double-buffered f32 x
        block fits the budget, capped so there are >= 2 grid steps (lets the
        "parallel" batch axis feed both of v7x's TensorCores)."""
    if batch <= 128:
        return max(8, _round_up(batch, 8))
    tb = 128
    for cand in (512, 256, 128):
        if 2 * cand * k_cols * bytes_per_elem <= x_budget_bytes:
            tb = cand
            break
    half = _round_up(pl.cdiv(batch, 2), 128)     # >= 2 grid steps when batch allows
    return max(128, min(tb, half))


def _plan(batch, k_p, hid_p, nc_p):
    """Choose the batch tile and a safe vmem_limit for the current chip."""
    cap = _vmem_capacity_bytes()
    x_budget = min(cap // 2, 48 << 20)           # x double-buffer budget (f32 streamed)
    tb = _choose_batch_tile(batch, k_p, 4, x_budget)
    # Rough VMEM need: double-buffered x + out tiles, double-buffered bf16 weights, f32 biases.
    need = (2 * tb * k_p * 4 + 2 * tb * nc_p * 4
            + 2 * (k_p * hid_p + hid_p * nc_p) * 2
            + 2 * (hid_p + nc_p) * 4)
    limit = int(min(cap - (8 << 20), max(32 << 20, need + (8 << 20))))
    return tb, limit


def mlp_classifier(x, packed):
    """x: (b, 3, H, W) float32 -> (b, num_classes) float32 logits."""
    b = x.shape[0]
    k = packed["input_size"]
    nc = packed["num_classes"]
    w1, bb1, w2, bb2 = packed["w1"], packed["b1"], packed["w2"], packed["b2"]
    k_p, hid_p = w1.shape
    nc_p = w2.shape[1]

    # Flatten exactly like torch's x.view(b, -1); keep native f32 (no host cast).
    x2d = x.reshape(b, -1)
    assert x2d.shape[1] == k
    if k_p != k:
        # Zero-pad the feature dim ONLY when 3*h*w isn't a multiple of 128
        # (required for correctness: padded lanes must be real zeros).
        x2d = jnp.pad(x2d, ((0, 0), (0, k_p - k)))

    tb, vmem_limit = _plan(b, k_p, hid_p, nc_p)
    grid = (pl.cdiv(b, tb),)                     # ragged final tile handled by Pallas

    out = pl.pallas_call(
        _mlp_kernel,
        grid=grid,
        in_specs=[
            pl.BlockSpec((tb, k_p), lambda i: (i, 0)),       # x: streamed, double-buffered
            pl.BlockSpec((k_p, hid_p), lambda i: (0, 0)),    # W1: VMEM-resident
            pl.BlockSpec((1, hid_p), lambda i: (0, 0)),      # b1: VMEM-resident
            pl.BlockSpec((hid_p, nc_p), lambda i: (0, 0)),   # W2: VMEM-resident
            pl.BlockSpec((1, nc_p), lambda i: (0, 0)),       # b2: VMEM-resident
        ],
        out_specs=pl.BlockSpec((tb, nc_p), lambda i: (i, 0)),
        out_shape=jax.ShapeDtypeStruct((b, nc_p), jnp.float32),
        compiler_params=pltpu.CompilerParams(
            dimension_semantics=("parallel",),               # megacore split on v7x
            vmem_limit_bytes=vmem_limit,
        ),
    )(x2d, w1, bb1, w2, bb2)

    # Slice off the padded class columns (real logits only).
    return out[:, :nc]


def _reference(x, params):
    """Pure-JAX reference with the same numerics (bf16 matmul inputs, f32 accum)."""
    (W1, b1), (W2, b2) = params
    h = x.reshape(x.shape[0], -1).astype(jnp.bfloat16)
    h = jnp.dot(h, W1.T.astype(jnp.bfloat16), preferred_element_type=jnp.float32) + b1
    h = jnp.maximum(h, 0.0).astype(jnp.bfloat16)
    return jnp.dot(h, W2.T.astype(jnp.bfloat16), preferred_element_type=jnp.float32) + b2


if __name__ == "__main__":
    # Small shapes consistent with the module's forward:
    # batch=2, 3 channels, 16x16 spatial -> input_size=768 (multiple of 128), hidden=2*w=32.
    B, H, W, NUM_CLASSES = 2, 16, 16, 6

    key = jax.random.PRNGKey(0)
    key_x, key_p = jax.random.split(key)
    x = jax.random.normal(key_x, (B, 3, H, W), dtype=jnp.float32)
    params = init_params(key_p, H, W, NUM_CLASSES)
    packed = prepare_params(params)              # one-time transpose/pad/cast

    logits = mlp_classifier(x, packed)
    logits = jax.block_until_ready(logits)

    ref = _reference(x, params)
    assert logits.shape == (B, NUM_CLASSES)
    assert jnp.allclose(logits, ref, atol=1e-2, rtol=1e-2), \
        float(jnp.max(jnp.abs(logits - ref)))

    print("KERNEL_OK")
</pallas_src>

<mosaic_0001>
module attributes {stable_mosaic.version = 11 : i64} {
  func.func @_mlp_kernel(%arg0: i32, %arg1: memref<8x768xf32, #tpu.memory_space<vmem>>, %arg2: memref<768x128xbf16, #tpu.memory_space<vmem>>, %arg3: memref<1x128xf32, #tpu.memory_space<vmem>>, %arg4: memref<128x128xbf16, #tpu.memory_space<vmem>>, %arg5: memref<1x128xf32, #tpu.memory_space<vmem>>, %arg6: memref<8x128xf32, #tpu.memory_space<vmem>>) attributes {dimension_semantics = [#tpu.dimension_semantics<parallel>], iteration_bounds = array<i64: 1>, scalar_prefetch = 0 : i64, scratch_operands = 0 : i64, tpu.core_type = #tpu.core_type<tc>, window_params = [{transform_indices = @transform_0, window_bounds = array<i64: 8, 768>}, {pipeline_mode = #tpu.pipeline_mode<synchronous>, transform_indices = @transform_1, window_bounds = array<i64: 768, 128>}, {pipeline_mode = #tpu.pipeline_mode<synchronous>, transform_indices = @transform_2, window_bounds = array<i64: 1, 128>}, {pipeline_mode = #tpu.pipeline_mode<synchronous>, transform_indices = @transform_3, window_bounds = array<i64: 128, 128>}, {pipeline_mode = #tpu.pipeline_mode<synchronous>, transform_indices = @transform_4, window_bounds = array<i64: 1, 128>}, {transform_indices = @transform_5, window_bounds = array<i64: 8, 128>}]} {
    %c0 = arith.constant 0 : index
    %c0_0 = arith.constant 0 : index
    %0 = vector.load %arg1[%c0, %c0_0] : memref<8x768xf32, #tpu.memory_space<vmem>>, vector<8x768xf32>
    %1 = arith.truncf %0 : vector<8x768xf32> to vector<8x768xbf16>
    %c0_1 = arith.constant 0 : index
    %c0_2 = arith.constant 0 : index
    %2 = vector.load %arg2[%c0_1, %c0_2] : memref<768x128xbf16, #tpu.memory_space<vmem>>, vector<768x128xbf16>
    %cst = arith.constant dense<0.000000e+00> : vector<8x128xf32>
    %3 = tpu.matmul %1, %2, %cst {dimension_numbers = #tpu.dot_dimension_numbers<[1], [0], [0], [1], [0, 0, 1, 1], [], []>} : vector<8x768xbf16>, vector<768x128xbf16>, vector<8x128xf32> -> vector<8x128xf32>
    %c0_3 = arith.constant 0 : index
    %c0_4 = arith.constant 0 : index
    %4 = vector.load %arg3[%c0_3, %c0_4] : memref<1x128xf32, #tpu.memory_space<vmem>>, vector<1x128xf32>
    %5 = vector.broadcast %4 : vector<1x128xf32> to vector<8x128xf32>
    %6 = arith.addf %3, %5 : vector<8x128xf32>
    %cst_5 = arith.constant 0.000000e+00 : f32
    %7 = vector.broadcast %cst_5 : f32 to vector<8x128xf32>
    %8 = arith.maximumf %6, %7 : vector<8x128xf32>
    %9 = arith.truncf %8 : vector<8x128xf32> to vector<8x128xbf16>
    %c0_6 = arith.constant 0 : index
    %c0_7 = arith.constant 0 : index
    %10 = vector.load %arg4[%c0_6, %c0_7] : memref<128x128xbf16, #tpu.memory_space<vmem>>, vector<128x128xbf16>
    %cst_8 = arith.constant dense<0.000000e+00> : vector<8x128xf32>
    %11 = tpu.matmul %9, %10, %cst_8 {dimension_numbers = #tpu.dot_dimension_numbers<[1], [0], [0], [1], [0, 0, 1, 1], [], []>} : vector<8x128xbf16>, vector<128x128xbf16>, vector<8x128xf32> -> vector<8x128xf32>
    %c0_9 = arith.constant 0 : index
    %c0_10 = arith.constant 0 : index
    %12 = vector.load %arg5[%c0_9, %c0_10] : memref<1x128xf32, #tpu.memory_space<vmem>>, vector<1x128xf32>
    %13 = vector.broadcast %12 : vector<1x128xf32> to vector<8x128xf32>
    %14 = arith.addf %11, %13 : vector<8x128xf32>
    %c0_11 = arith.constant 0 : index
    %c0_12 = arith.constant 0 : index
    %15 = vector.load %arg6[%c0_11, %c0_12] : memref<8x128xf32, #tpu.memory_space<vmem>>, vector<8x128xf32>
    tpu.vector_store %arg6[%c0_11, %c0_12], %14 {strides = array<i32>} : memref<8x128xf32, #tpu.memory_space<vmem>>, vector<8x128xf32>,
    return
  }
  func.func @transform_0(%arg0: i32) -> (i32, i32) {
    %c0_i32 = arith.constant 0 : i32
    %c0_i32_0 = arith.constant 0 : i32
    return %arg0, %c0_i32 : i32, i32
  }
  func.func @transform_1(%arg0: i32) -> (i32, i32) {
    %c0_i32 = arith.constant 0 : i32
    %c0_i32_0 = arith.constant 0 : i32
    %c0_i32_1 = arith.constant 0 : i32
    return %c0_i32, %c0_i32_0 : i32, i32
  }
  func.func @transform_2(%arg0: i32) -> (i32, i32) {
    %c0_i32 = arith.constant 0 : i32
    %c0_i32_0 = arith.constant 0 : i32
    %c0_i32_1 = arith.constant 0 : i32
    return %c0_i32, %c0_i32_0 : i32, i32
  }
  func.func @transform_3(%arg0: i32) -> (i32, i32) {
    %c0_i32 = arith.constant 0 : i32
    %c0_i32_0 = arith.constant 0 : i32
    %c0_i32_1 = arith.constant 0 : i32
    return %c0_i32, %c0_i32_0 : i32, i32
  }
  func.func @transform_4(%arg0: i32) -> (i32, i32) {
    %c0_i32 = arith.constant 0 : i32
    %c0_i32_0 = arith.constant 0 : i32
    %c0_i32_1 = arith.constant 0 : i32
    return %c0_i32, %c0_i32_0 : i32, i32
  }
  func.func @transform_5(%arg0: i32) -> (i32, i32) {
    %c0_i32 = arith.constant 0 : i32
    %c0_i32_0 = arith.constant 0 : i32
    return %arg0, %c0_i32 : i32, i32
  }
}

</mosaic_0001>

<llo_original>
// kernel: tpu_custom_call.1
$region0: #{tpu_custom_call.1}
  #allocation0 [shape = 'u32[]', space=smem, size = 0x4, offset = 0x4, fixed_abs, tag = 'smem constant byte address 0x4 - core index']
  #allocation1 [shape = 'u32[72,128]{1,0:T(1,128)}', space=vmem, size = 0x9000, scoped, tag = 'internal scratch']
  %s0 = inlined_call_operand.hbm [shape: f32[2,768], index: 0, kind: input, shape index: {}]
  %s1 = inlined_call_operand.hbm [shape: bf16[768,128], index: 1, kind: input, shape index: {}]
  %s2 = inlined_call_operand.vmem [shape: f32[1,128], index: 2, kind: input, shape index: {}]
  %s3 = inlined_call_operand.hbm [shape: bf16[128,128], index: 3, kind: input, shape index: {}]
  %s4 = inlined_call_operand.vmem [shape: f32[1,128], index: 4, kind: input, shape index: {}]
  %s5 = inlined_call_operand.hbm [shape: f32[2,128], index: 5, kind: output, shape index: {}]
  %s6 = sld [smem:[#allocation0]]
  $region42: #{tpu_custom_call.1} parent=0
    _
  %s8 = ssub.s32 1, %s6
  %s9 = scalar_select 0, %s8, %s6
  $region1: #{tpu_custom_call.1} parent=0
    #allocation2 [shape = 'u8[24576]{0}', space=vmem, size = 0x6000, scoped, tag = 'input window, operand 0, single buffered']
    #allocation3 [shape = 's32[1]{0}', space=sflag, size = 0x4, scoped, tag = 'scoped memory for tpu_custom_call.1']
    #allocation4 [shape = 's32[1]{0}', space=sflag, size = 0x4, scoped, tag = 'scoped memory for tpu_custom_call.1']
    #allocation5 [shape = 'u8[196608]{0}', space=vmem, size = 0x30000, scoped, tag = 'input window, operand 1, single buffered']
    #allocation6 [shape = 's32[1]{0}', space=sflag, size = 0x4, scoped, tag = 'scoped memory for tpu_custom_call.1']
    #allocation7 [shape = 'u8[32768]{0}', space=vmem, size = 0x8000, scoped, tag = 'input window, operand 3, single buffered']
    #allocation8 [shape = 'u8[4096]{0}', space=vmem, size = 0x1000, scoped, tag = 'output window, operand 0, single buffered']
    %10 = vsyncpa [#allocation3], 0
    %11 = vsyncpa [#allocation6], 0
    %12 = vsyncpa [#allocation4], 0
    // Predicated region
    $region2: #{tpu_custom_call.1} parent=1 // pred_check
      _
    $region3: #{tpu_custom_call.1} parent=1 // pred_check_branch
      %14 = sbr.rel (0) target = $region5
    $region4: #{tpu_custom_call.1} parent=1 // pred_region
      %16 = vsyncadd [#allocation3], 576
      %s17 = sshll.u32 %s0, 4
      %s18 = int_to_ptr.hbm [resolvable:$true] %s17
      %s19 = sshll.u32 [#allocation2], 4
      %s20 = int_to_ptr.vmem [resolvable:$true] %s19
      %25 = dma.hbm_to_vmem [thread:$0]  %s18, 192, %s20, [#allocation3], 192, 192, 12
    $region5: #{tpu_custom_call.1} parent=1 // pred_fallthru
      _
    // Predicated region
    $region6: #{tpu_custom_call.1} parent=1 // pred_check
      _
    $region7: #{tpu_custom_call.1} parent=1 // pred_check_branch
      %27 = sbr.rel (0) target = $region9
    $region8: #{tpu_custom_call.1} parent=1 // pred_region
      %29 = vsyncadd [#allocation6], 0
      %s30 = sshll.u32 %s1, 4
      %s31 = int_to_ptr.hbm [resolvable:$true] %s30
      %s32 = sshll.u32 [#allocation5], 4
      %s33 = int_to_ptr.vmem [resolvable:$true] %s32
      %38 = dma.hbm_to_vmem [thread:$0]  %s31, 6144, %s33, [#allocation6], 64, 64, 4
    $region9: #{tpu_custom_call.1} parent=1 // pred_fallthru
      _
    // Predicated region
    $region10: #{tpu_custom_call.1} parent=1 // pred_check
      _
    $region11: #{tpu_custom_call.1} parent=1 // pred_check_branch
      %40 = sbr.rel (0) target = $region13
    $region12: #{tpu_custom_call.1} parent=1 // pred_region
      _
    $region13: #{tpu_custom_call.1} parent=1 // pred_fallthru
      _
    // Predicated region
    $region14: #{tpu_custom_call.1} parent=1 // pred_check
      _
    $region15: #{tpu_custom_call.1} parent=1 // pred_check_branch
      %42 = sbr.rel (0) target = $region17
    $region16: #{tpu_custom_call.1} parent=1 // pred_region
      %44 = vsyncadd [#allocation6], 0
      %s45 = sshll.u32 %s3, 4
      %s46 = int_to_ptr.hbm [resolvable:$true] %s45
      %s47 = sshll.u32 [#allocation7], 4
      %s48 = int_to_ptr.vmem [resolvable:$true] %s47
      %53 = dma.hbm_to_vmem [thread:$0]  %s46, 1024, %s48, [#allocation6], 64, 64, 4
    $region17: #{tpu_custom_call.1} parent=1 // pred_fallthru
      _
    // Predicated region
    $region18: #{tpu_custom_call.1} parent=1 // pred_check
      _
    $region19: #{tpu_custom_call.1} parent=1 // pred_check_branch
      %55 = sbr.rel (0) target = $region21
    $region20: #{tpu_custom_call.1} parent=1 // pred_region
      _
    $region21: #{tpu_custom_call.1} parent=1 // pred_fallthru
      _
    // Predicated region
    $region22: #{tpu_custom_call.1} parent=1 // pred_check
      _
    $region23: #{tpu_custom_call.1} parent=1 // pred_check_branch
      %57 = sbr.rel (0) target = $region25
    $region24: #{tpu_custom_call.1} parent=1 // pred_region
      %59 = dma.done [#allocation3], 768
    $region25: #{tpu_custom_call.1} parent=1 // pred_fallthru
      _
    // Predicated region
    $region26: #{tpu_custom_call.1} parent=1 // pred_check
      _
    $region27: #{tpu_custom_call.1} parent=1 // pred_check_branch
      %61 = sbr.rel (0) target = $region29
    $region28: #{tpu_custom_call.1} parent=1 // pred_region
      %63 = dma.done [#allocation6], 6144
    $region29: #{tpu_custom_call.1} parent=1 // pred_fallthru
      _
    // Predicated region
    $region30: #{tpu_custom_call.1} parent=1 // pred_check
      _
    $region31: #{tpu_custom_call.1} parent=1 // pred_check_branch
      %65 = sbr.rel (0) target = $region33
    $region32: #{tpu_custom_call.1} parent=1 // pred_region
      %67 = dma.done [#allocation6], 1024
    $region33: #{tpu_custom_call.1} parent=1 // pred_fallthru
      _
    %v68 = vld [vmem:[#allocation2] sm:$0xff]
    %v69 = vld [vmem:[#allocation2 + $0x8] sm:$0xf]
    %v70 = vld [vmem:[#allocation2 + $0xc] sm:$0xff]
    %v71 = vld [vmem:[#allocation2 + $0x14] sm:$0xf]
    %v72 = vld [vmem:[#allocation2 + $0x18] sm:$0xff]
    %v73 = vld [vmem:[#allocation2 + $0x20] sm:$0xf]
    %v74 = vld [vmem:[#allocation2 + $0x24] sm:$0xff]
    %v75 = vld [vmem:[#allocation2 + $0x2c] sm:$0xf]
    %84 = vst [vmem:[#allocation1] ss:$4 sm:$0xff] %v68
    %s85 = scalar_lea.vmem [#allocation1], 1
    %86 = vst [vmem:[%s85] ss:$4 sm:$0xff] %v70
    %s87 = scalar_lea.vmem [#allocation1], 2
    %88 = vst [vmem:[%s87] ss:$4 sm:$0xff] %v72
    %s89 = scalar_lea.vmem [#allocation1], 3
    %90 = vst [vmem:[%s89] ss:$4 sm:$0xff] %v74
    %s91 = scalar_lea.vmem [#allocation1], 32
    %92 = vst [vmem:[%s91] ss:$4 sm:$0xff] %v69
    %s93 = scalar_lea.vmem [#allocation1], 33
    %94 = vst [vmem:[%s93] ss:$4 sm:$0xff] %v71
    %s95 = scalar_lea.vmem [#allocation1], 34
    %96 = vst [vmem:[%s95] ss:$4 sm:$0xff] %v73
    %s97 = scalar_lea.vmem [#allocation1], 35
    %98 = vst [vmem:[%s97] ss:$4 sm:$0xff] %v75
    %v99 = vld.sshfl [vmem:[#allocation1] sm:$0xff pattern:$0x73625140]
    %v100 = vld.sshfl [vmem:[#allocation1 + $0x8] sm:$0xff pattern:$0x73625140]
    %v101 = vld.sshfl [vmem:[#allocation1 + $0x10] sm:$0xff pattern:$0x73625140]
    %v102 = vld.sshfl [vmem:[#allocation1 + $0x18] sm:$0xff pattern:$0x73625140]
    %v103 = vld.sshfl [vmem:[#allocation1 + $0x20] sm:$0xff pattern:$0x73625140]
    %v104 = vld.sshfl [vmem:[#allocation1 + $0x28] sm:$0xff pattern:$0x73625140]
    %v111 = vpack.c.bf16 %v99, %v99
    %v112 = vpack.c.bf16 %v100, %v100
    %v113 = vpack.c.bf16 %v101, %v101
    %v114 = vpack.c.bf16 %v102, %v102
    %v115 = vpack.c.bf16 %v103, %v103
    %v116 = vpack.c.bf16 %v104, %v104
    %v117 = vld [vmem:[#allocation5] sm:$0xf]
    %v118 = vld [vmem:[#allocation5 + $0x4] sm:$0xf]
    %v119 = vld [vmem:[#allocation5 + $0x8] sm:$0xf]
    %v120 = vld [vmem:[#allocation5 + $0xc] sm:$0xf]
    %v121 = vld [vmem:[#allocation5 + $0x10] sm:$0xf]
    %v122 = vld [vmem:[#allocation5 + $0x14] sm:$0xf]
    %v123 = vld [vmem:[#allocation5 + $0x18] sm:$0xf]
    %v124 = vld [vmem:[#allocation5 + $0x1c] sm:$0xf]
    %v125 = vld [vmem:[#allocation5 + $0x20] sm:$0xf]
    %v126 = vld [vmem:[#allocation5 + $0x24] sm:$0xf]
    %v127 = vld [vmem:[#allocation5 + $0x28] sm:$0xf]
    %v128 = vld [vmem:[#allocation5 + $0x2c] sm:$0xf]
    %v129 = vld [vmem:[#allocation5 + $0x30] sm:$0xf]
    %v130 = vld [vmem:[#allocation5 + $0x34] sm:$0xf]
    %v131 = vld [vmem:[#allocation5 + $0x38] sm:$0xf]
    %v132 = vld [vmem:[#allocation5 + $0x3c] sm:$0xf]
    %v133 = vld [vmem:[#allocation5 + $0x40] sm:$0xf]
    %v134 = vld [vmem:[#allocation5 + $0x44] sm:$0xf]
    %v135 = vld [vmem:[#allocation5 + $0x48] sm:$0xf]
    %v136 = vld [vmem:[#allocation5 + $0x4c] sm:$0xf]
    %v137 = vld [vmem:[#allocation5 + $0x50] sm:$0xf]
    %v138 = vld [vmem:[#allocation5 + $0x54] sm:$0xf]
    %v139 = vld [vmem:[#allocation5 + $0x58] sm:$0xf]
    %v140 = vld [vmem:[#allocation5 + $0x5c] sm:$0xf]
    %v141 = vld [vmem:[#allocation5 + $0x60] sm:$0xf]
    %v142 = vld [vmem:[#allocation5 + $0x64] sm:$0xf]
    %v143 = vld [vmem:[#allocation5 + $0x68] sm:$0xf]
    %v144 = vld [vmem:[#allocation5 + $0x6c] sm:$0xf]
    %v145 = vld [vmem:[#allocation5 + $0x70] sm:$0xf]
    %v146 = vld [vmem:[#allocation5 + $0x74] sm:$0xf]
    %v147 = vld [vmem:[#allocation5 + $0x78] sm:$0xf]
    %v148 = vld [vmem:[#allocation5 + $0x7c] sm:$0xf]
    %v149 = vld [vmem:[#allocation5 + $0x80] sm:$0xf]
    %v150 = vld [vmem:[#allocation5 + $0x84] sm:$0xf]
    %v151 = vld [vmem:[#allocation5 + $0x88] sm:$0xf]
    %v152 = vld [vmem:[#allocation5 + $0x8c] sm:$0xf]
    %v153 = vld [vmem:[#allocation5 + $0x90] sm:$0xf]
    %v154 = vld [vmem:[#allocation5 + $0x94] sm:$0xf]
    %v155 = vld [vmem:[#allocation5 + $0x98] sm:$0xf]
    %v156 = vld [vmem:[#allocation5 + $0x9c] sm:$0xf]
    %v157 = vld [vmem:[#allocation5 + $0xa0] sm:$0xf]
    %v158 = vld [vmem:[#allocation5 + $0xa4] sm:$0xf]
    %v159 = vld [vmem:[#allocation5 + $0xa8] sm:$0xf]
    %v160 = vld [vmem:[#allocation5 + $0xac] sm:$0xf]
    %v161 = vld [vmem:[#allocation5 + $0xb0] sm:$0xf]
    %v162 = vld [vmem:[#allocation5 + $0xb4] sm:$0xf]
    %v163 = vld [vmem:[#allocation5 + $0xb8] sm:$0xf]
    %v164 = vld [vmem:[#allocation5 + $0xbc] sm:$0xf]
    %v165 = vld [vmem:[#allocation5 + $0xc0] sm:$0xf]
    %v166 = vld [vmem:[#allocation5 + $0xc4] sm:$0xf]
    %v167 = vld [vmem:[#allocation5 + $0xc8] sm:$0xf]
    %v168 = vld [vmem:[#allocation5 + $0xcc] sm:$0xf]
    %v169 = vld [vmem:[#allocation5 + $0xd0] sm:$0xf]
    %v170 = vld [vmem:[#allocation5 + $0xd4] sm:$0xf]
    %v171 = vld [vmem:[#allocation5 + $0xd8] sm:$0xf]
    %v172 = vld [vmem:[#allocation5 + $0xdc] sm:$0xf]
    %v173 = vld [vmem:[#allocation5 + $0xe0] sm:$0xf]
    %v174 = vld [vmem:[#allocation5 + $0xe4] sm:$0xf]
    %v175 = vld [vmem:[#allocation5 + $0xe8] sm:$0xf]
    %v176 = vld [vmem:[#allocation5 + $0xec] sm:$0xf]
    %v177 = vld [vmem:[#allocation5 + $0xf0] sm:$0xf]
    %v178 = vld [vmem:[#allocation5 + $0xf4] sm:$0xf]
    %v179 = vld [vmem:[#allocation5 + $0xf8] sm:$0xf]
    %v180 = vld [vmem:[#allocation5 + $0xfc] sm:$0xf]
    %v181 = vld [vmem:[#allocation5 + $0x100] sm:$0xf]
    %v182 = vld [vmem:[#allocation5 + $0x104] sm:$0xf]
    %v183 = vld [vmem:[#allocation5 + $0x108] sm:$0xf]
    %v184 = vld [vmem:[#allocation5 + $0x10c] sm:$0xf]
    %v185 = vld [vmem:[#allocation5 + $0x110] sm:$0xf]
    %v186 = vld [vmem:[#allocation5 + $0x114] sm:$0xf]
    %v187 = vld [vmem:[#allocation5 + $0x118] sm:$0xf]
    %v188 = vld [vmem:[#allocation5 + $0x11c] sm:$0xf]
    %v189 = vld [vmem:[#allocation5 + $0x120] sm:$0xf]
    %v190 = vld [vmem:[#allocation5 + $0x124] sm:$0xf]
    %v191 = vld [vmem:[#allocation5 + $0x128] sm:$0xf]
    %v192 = vld [vmem:[#allocation5 + $0x12c] sm:$0xf]
    %v193 = vld [vmem:[#allocation5 + $0x130] sm:$0xf]
    %v194 = vld [vmem:[#allocation5 + $0x134] sm:$0xf]
    %v195 = vld [vmem:[#allocation5 + $0x138] sm:$0xf]
    %v196 = vld [vmem:[#allocation5 + $0x13c] sm:$0xf]
    %v197 = vld [vmem:[#allocation5 + $0x140] sm:$0xf]
    %v198 = vld [vmem:[#allocation5 + $0x144] sm:$0xf]
    %v199 = vld [vmem:[#allocation5 + $0x148] sm:$0xf]
    %v200 = vld [vmem:[#allocation5 + $0x14c] sm:$0xf]
    %v201 = vld [vmem:[#allocation5 + $0x150] sm:$0xf]
    %v202 = vld [vmem:[#allocation5 + $0x154] sm:$0xf]
    %v203 = vld [vmem:[#allocation5 + $0x158] sm:$0xf]
    %v204 = vld [vmem:[#allocation5 + $0x15c] sm:$0xf]
    %v205 = vld [vmem:[#allocation5 + $0x160] sm:$0xf]
    %v206 = vld [vmem:[#allocation5 + $0x164] sm:$0xf]
    %v207 = vld [vmem:[#allocation5 + $0x168] sm:$0xf]
    %v208 = vld [vmem:[#allocation5 + $0x16c] sm:$0xf]
    %v209 = vld [vmem:[#allocation5 + $0x170] sm:$0xf]
    %v210 = vld [vmem:[#allocation5 + $0x174] sm:$0xf]
    %v211 = vld [vmem:[#allocation5 + $0x178] sm:$0xf]
    %v212 = vld [vmem:[#allocation5 + $0x17c] sm:$0xf]
    %v213 = vld [vmem:[%s2] sm:$0x1]
    %v215 = vperm.slane %v213, 0
    %v313 = vunpack.c.l.b16 %v117
    %v314 = vunpack.c.l.b16 %v118
    %v315 = vunpack.c.l.b16 %v119
    %v316 = vunpack.c.l.b16 %v120
    %v317 = vunpack.c.l.b16 %v121
    %v318 = vunpack.c.l.b16 %v122
    %v319 = vunpack.c.l.b16 %v123
    %v320 = vunpack.c.l.b16 %v124
    %v321 = vunpack.c.l.b16 %v125
    %v322 = vunpack.c.l.b16 %v126
    %v323 = vunpack.c.l.b16 %v127
    %v324 = vunpack.c.l.b16 %v128
    %v325 = vunpack.c.l.b16 %v129
    %v326 = vunpack.c.l.b16 %v130
    %v327 = vunpack.c.l.b16 %v131
    %v328 = vunpack.c.l.b16 %v132
    %v329 = vunpack.c.l.b16 %v133
    %v330 = vunpack.c.l.b16 %v134
    %v331 = vunpack.c.l.b16 %v135
    %v332 = vunpack.c.l.b16 %v136
    %v333 = vunpack.c.l.b16 %v137
    %v334 = vunpack.c.l.b16 %v138
    %v335 = vunpack.c.l.b16 %v139
    %v336 = vunpack.c.l.b16 %v140
    %v337 = vunpack.c.l.b16 %v141
    %v338 = vunpack.c.l.b16 %v142
    %v339 = vunpack.c.l.b16 %v143
    %v340 = vunpack.c.l.b16 %v144
    %v341 = vunpack.c.l.b16 %v145
    %v342 = vunpack.c.l.b16 %v146
    %v343 = vunpack.c.l.b16 %v147
    %v344 = vunpack.c.l.b16 %v148
    %v345 = vunpack.c.l.b16 %v149
    %v346 = vunpack.c.l.b16 %v150
    %v347 = vunpack.c.l.b16 %v151
    %v348 = vunpack.c.l.b16 %v152
    %v349 = vunpack.c.l.b16 %v153
    %v350 = vunpack.c.l.b16 %v154
    %v351 = vunpack.c.l.b16 %v155
    %v352 = vunpack.c.l.b16 %v156
    %v353 = vunpack.c.l.b16 %v157
    %v354 = vunpack.c.l.b16 %v158
    %v355 = vunpack.c.l.b16 %v159
    %v356 = vunpack.c.l.b16 %v160
    %v357 = vunpack.c.l.b16 %v161
    %v358 = vunpack.c.l.b16 %v162
    %v359 = vunpack.c.l.b16 %v163
    %v360 = vunpack.c.l.b16 %v164
    %v361 = vunpack.c.l.b16 %v165
    %v362 = vunpack.c.l.b16 %v166
    %v363 = vunpack.c.l.b16 %v167
    %v364 = vunpack.c.l.b16 %v168
    %v365 = vunpack.c.l.b16 %v169
    %v366 = vunpack.c.l.b16 %v170
    %v367 = vunpack.c.l.b16 %v171
    %v368 = vunpack.c.l.b16 %v172
    %v369 = vunpack.c.l.b16 %v173
    %v370 = vunpack.c.l.b16 %v174
    %v371 = vunpack.c.l.b16 %v175
    %v372 = vunpack.c.l.b16 %v176
    %v373 = vunpack.c.l.b16 %v177
    %v374 = vunpack.c.l.b16 %v178
    %v375 = vunpack.c.l.b16 %v179
    %v376 = vunpack.c.l.b16 %v180
    %v377 = vunpack.c.l.b16 %v181
    %v378 = vunpack.c.l.b16 %v182
    %v379 = vunpack.c.l.b16 %v183
    %v380 = vunpack.c.l.b16 %v184
    %v381 = vunpack.c.l.b16 %v185
    %v382 = vunpack.c.l.b16 %v186
    %v383 = vunpack.c.l.b16 %v187
    %v384 = vunpack.c.l.b16 %v188
    %v385 = vunpack.c.l.b16 %v189
    %v386 = vunpack.c.l.b16 %v190
    %v387 = vunpack.c.l.b16 %v191
    %v388 = vunpack.c.l.b16 %v192
    %v389 = vunpack.c.l.b16 %v193
    %v390 = vunpack.c.l.b16 %v194
    %v391 = vunpack.c.l.b16 %v195
    %v392 = vunpack.c.l.b16 %v196
    %v393 = vunpack.c.l.b16 %v197
    %v394 = vunpack.c.l.b16 %v198
    %v395 = vunpack.c.l.b16 %v199
    %v396 = vunpack.c.l.b16 %v200
    %v397 = vunpack.c.l.b16 %v201
    %v398 = vunpack.c.l.b16 %v202
    %v399 = vunpack.c.l.b16 %v203
    %v400 = vunpack.c.l.b16 %v204
    %v401 = vunpack.c.l.b16 %v205
    %v402 = vunpack.c.l.b16 %v206
    %v403 = vunpack.c.l.b16 %v207
    %v404 = vunpack.c.l.b16 %v208
    %v405 = vunpack.c.l.b16 %v209
    %v406 = vunpack.c.l.b16 %v210
    %v407 = vunpack.c.l.b16 %v211
    %v408 = vunpack.c.l.b16 %v212
    %v409 = vpack.c.b16 %v314, %v313
    %v410 = vpack.c.b16 %v316, %v315
    %v411 = vpack.c.b16 %v318, %v317
    %v412 = vpack.c.b16 %v320, %v319
    %v413 = vpack.c.b16 %v322, %v321
    %v414 = vpack.c.b16 %v324, %v323
    %v415 = vpack.c.b16 %v326, %v325
    %v416 = vpack.c.b16 %v328, %v327
    %v417 = vpack.c.b16 %v330, %v329
    %v418 = vpack.c.b16 %v332, %v331
    %v419 = vpack.c.b16 %v334, %v333
    %v420 = vpack.c.b16 %v336, %v335
    %v421 = vpack.c.b16 %v338, %v337
    %v422 = vpack.c.b16 %v340, %v339
    %v423 = vpack.c.b16 %v342, %v341
    %v424 = vpack.c.b16 %v344, %v343
    %v425 = vpack.c.b16 %v346, %v345
    %v426 = vpack.c.b16 %v348, %v347
    %v427 = vpack.c.b16 %v350, %v349
    %v428 = vpack.c.b16 %v352, %v351
    %v429 = vpack.c.b16 %v354, %v353
    %v430 = vpack.c.b16 %v356, %v355
    %v431 = vpack.c.b16 %v358, %v357
    %v432 = vpack.c.b16 %v360, %v359
    %v433 = vpack.c.b16 %v362, %v361
    %v434 = vpack.c.b16 %v364, %v363
    %v435 = vpack.c.b16 %v366, %v365
    %v436 = vpack.c.b16 %v368, %v367
    %v437 = vpack.c.b16 %v370, %v369
    %v438 = vpack.c.b16 %v372, %v371
    %v439 = vpack.c.b16 %v374, %v373
    %v440 = vpack.c.b16 %v376, %v375
    %v441 = vpack.c.b16 %v378, %v377
    %v442 = vpack.c.b16 %v380, %v379
    %v443 = vpack.c.b16 %v382, %v381
    %v444 = vpack.c.b16 %v384, %v383
    %v445 = vpack.c.b16 %v386, %v385
    %v446 = vpack.c.b16 %v388, %v387
    %v447 = vpack.c.b16 %v390, %v389
    %v448 = vpack.c.b16 %v392, %v391
    %v449 = vpack.c.b16 %v394, %v393
    %v450 = vpack.c.b16 %v396, %v395
    %v451 = vpack.c.b16 %v398, %v397
    %v452 = vpack.c.b16 %v400, %v399
    %v453 = vpack.c.b16 %v402, %v401
    %v454 = vpack.c.b16 %v404, %v403
    %v455 = vpack.c.b16 %v406, %v405
    %v456 = vpack.c.b16 %v408, %v407
    %505 = vmatpush.bf16.msra.mxu0 %v416
    %506 = vmatpush.bf16.msra.mxu0 %v415
    %507 = vmatpush.bf16.msra.mxu0 %v414
    %508 = vmatpush.bf16.msra.mxu0 %v413
    %509 = vmatpush.bf16.msra.mxu0 %v412
    %510 = vmatpush.bf16.msra.mxu0 %v411
    %511 = vmatpush.bf16.msra.mxu0 %v410
    %512 = vmatpush.bf16.msra.mxu0 %v409
    %513 = vmatmul.bf16.gmra.mxu0 %v111
    %v514 = vpop.f32.mrf.mxu0
    %v515 = vadd.f32 %v215, %v514
    %v516 = vpop.f32.mrf.mxu0
    %517 = vdwg.mxu0
    %518 = vmatpush.bf16.msra.mxu0 %v424
    %519 = vmatpush.bf16.msra.mxu0 %v423
    %520 = vmatpush.bf16.msra.mxu0 %v422
    %521 = vmatpush.bf16.msra.mxu0 %v421
    %522 = vmatpush.bf16.msra.mxu0 %v420
    %523 = vmatpush.bf16.msra.mxu0 %v419
    %524 = vmatpush.bf16.msra.mxu0 %v418
    %525 = vmatpush.bf16.msra.mxu0 %v417
    %526 = vmatmul.bf16.gmra.mxu0 %v112
    %v527 = vpop.f32.mrf.mxu0
    %v528 = vadd.f32 %v515, %v527
    %v529 = vpop.f32.mrf.mxu0
    %530 = vdwg.mxu0
    %531 = vmatpush.bf16.msra.mxu0 %v432
    %532 = vmatpush.bf16.msra.mxu0 %v431
    %533 = vmatpush.bf16.msra.mxu0 %v430
    %534 = vmatpush.bf16.msra.mxu0 %v429
    %535 = vmatpush.bf16.msra.mxu0 %v428
    %536 = vmatpush.bf16.msra.mxu0 %v427
    %537 = vmatpush.bf16.msra.mxu0 %v426
    %538 = vmatpush.bf16.msra.mxu0 %v425
    %539 = vmatmul.bf16.gmra.mxu0 %v113
    %v540 = vpop.f32.mrf.mxu0
    %v541 = vadd.f32 %v528, %v540
    %v542 = vpop.f32.mrf.mxu0
    %543 = vdwg.mxu0
    %544 = vmatpush.bf16.msra.mxu0 %v440
    %545 = vmatpush.bf16.msra.mxu0 %v439
    %546 = vmatpush.bf16.msra.mxu0 %v438
    %547 = vmatpush.bf16.msra.mxu0 %v437
    %548 = vmatpush.bf16.msra.mxu0 %v436
    %549 = vmatpush.bf16.msra.mxu0 %v435
    %550 = vmatpush.bf16.msra.mxu0 %v434
    %551 = vmatpush.bf16.msra.mxu0 %v433
    %552 = vmatmul.bf16.gmra.mxu0 %v114
    %v553 = vpop.f32.mrf.mxu0
    %v554 = vadd.f32 %v541, %v553
    %v555 = vpop.f32.mrf.mxu0
    %556 = vdwg.mxu0
    %557 = vmatpush.bf16.msra.mxu0 %v448
    %558 = vmatpush.bf16.msra.mxu0 %v447
    %559 = vmatpush.bf16.msra.mxu0 %v446
    %560 = vmatpush.bf16.msra.mxu0 %v445
    %561 = vmatpush.bf16.msra.mxu0 %v444
    %562 = vmatpush.bf16.msra.mxu0 %v443
    %563 = vmatpush.bf16.msra.mxu0 %v442
    %564 = vmatpush.bf16.msra.mxu0 %v441
    %565 = vmatmul.bf16.gmra.mxu0 %v115
    %v566 = vpop.f32.mrf.mxu0
    %v567 = vadd.f32 %v554, %v566
    %v568 = vpop.f32.mrf.mxu0
    %569 = vdwg.mxu0
    %570 = vmatpush.bf16.msra.mxu0 %v456
    %571 = vmatpush.bf16.msra.mxu0 %v455
    %572 = vmatpush.bf16.msra.mxu0 %v454
    %573 = vmatpush.bf16.msra.mxu0 %v453
    %574 = vmatpush.bf16.msra.mxu0 %v452
    %575 = vmatpush.bf16.msra.mxu0 %v451
    %576 = vmatpush.bf16.msra.mxu0 %v450
    %577 = vmatpush.bf16.msra.mxu0 %v449
    %578 = vmatmul.bf16.gmra.mxu0 %v116
    %v579 = vpop.f32.mrf.mxu0
    %v580 = vadd.f32 %v567, %v579
    %v581 = vpop.f32.mrf.mxu0
    %582 = vdwg.mxu0
    %v583 = vmax.f32 %v580, 0.0
    %v584 = vpack.c.bf16 %v583, %v583
    %v585 = vld [vmem:[#allocation7] sm:$0xf]
    %v586 = vld [vmem:[#allocation7 + $0x4] sm:$0xf]
    %v587 = vld [vmem:[#allocation7 + $0x8] sm:$0xf]
    %v588 = vld [vmem:[#allocation7 + $0xc] sm:$0xf]
    %v589 = vld [vmem:[#allocation7 + $0x10] sm:$0xf]
    %v590 = vld [vmem:[#allocation7 + $0x14] sm:$0xf]
    %v591 = vld [vmem:[#allocation7 + $0x18] sm:$0xf]
    %v592 = vld [vmem:[#allocation7 + $0x1c] sm:$0xf]
    %v593 = vld [vmem:[#allocation7 + $0x20] sm:$0xf]
    %v594 = vld [vmem:[#allocation7 + $0x24] sm:$0xf]
    %v595 = vld [vmem:[#allocation7 + $0x28] sm:$0xf]
    %v596 = vld [vmem:[#allocation7 + $0x2c] sm:$0xf]
    %v597 = vld [vmem:[#allocation7 + $0x30] sm:$0xf]
    %v598 = vld [vmem:[#allocation7 + $0x34] sm:$0xf]
    %v599 = vld [vmem:[#allocation7 + $0x38] sm:$0xf]
    %v600 = vld [vmem:[#allocation7 + $0x3c] sm:$0xf]
    %v601 = vld [vmem:[%s4] sm:$0x1]
    %v603 = vperm.slane %v601, 0
    %v621 = vunpack.c.l.b16 %v585
    %v622 = vunpack.c.l.b16 %v586
    %v623 = vunpack.c.l.b16 %v587
    %v624 = vunpack.c.l.b16 %v588
    %v625 = vunpack.c.l.b16 %v589
    %v626 = vunpack.c.l.b16 %v590
    %v627 = vunpack.c.l.b16 %v591
    %v628 = vunpack.c.l.b16 %v592
    %v629 = vunpack.c.l.b16 %v593
    %v630 = vunpack.c.l.b16 %v594
    %v631 = vunpack.c.l.b16 %v595
    %v632 = vunpack.c.l.b16 %v596
    %v633 = vunpack.c.l.b16 %v597
    %v634 = vunpack.c.l.b16 %v598
    %v635 = vunpack.c.l.b16 %v599
    %v636 = vunpack.c.l.b16 %v600
    %v637 = vpack.c.b16 %v622, %v621
    %v638 = vpack.c.b16 %v624, %v623
    %v639 = vpack.c.b16 %v626, %v625
    %v640 = vpack.c.b16 %v628, %v627
    %v641 = vpack.c.b16 %v630, %v629
    %v642 = vpack.c.b16 %v632, %v631
    %v643 = vpack.c.b16 %v634, %v633
    %v644 = vpack.c.b16 %v636, %v635
    %653 = vmatpush.bf16.msra.mxu0 %v644
    %654 = vmatpush.bf16.msra.mxu0 %v643
    %655 = vmatpush.bf16.msra.mxu0 %v642
    %656 = vmatpush.bf16.msra.mxu0 %v641
    %657 = vmatpush.bf16.msra.mxu0 %v640
    %658 = vmatpush.bf16.msra.mxu0 %v639
    %659 = vmatpush.bf16.msra.mxu0 %v638
    %660 = vmatpush.bf16.msra.mxu0 %v637
    %661 = vmatmul.bf16.gmra.mxu0 %v584
    %v662 = vpop.f32.mrf.mxu0
    %v663 = vadd.f32 %v603, %v662
    %v664 = vpop.f32.mrf.mxu0
    %665 = vdwg.mxu0
    %666 = vst [vmem:[#allocation8] sm:$0xff] %v663
    // Predicated region
    $region34: #{tpu_custom_call.1} parent=1 // pred_check
      _
    $region35: #{tpu_custom_call.1} parent=1 // pred_check_branch
      %668 = sbr.rel (0) target = $region37
    $region36: #{tpu_custom_call.1} parent=1 // pred_region
      %670 = vsyncadd [#allocation4], 96
      %s671 = sshll.u32 [#allocation8], 4
      %s672 = int_to_ptr.vmem [resolvable:$true] %s671
      %s673 = sshll.u32 %s5, 4
      %s674 = int_to_ptr.hbm [resolvable:$true] %s673
      %679 = dma.vmem_to_hbm [thread:$0]  %s672, 32, %s674, [#allocation4], 32, 32, 2
    $region37: #{tpu_custom_call.1} parent=1 // pred_fallthru
      _
    // Predicated region
    $region38: #{tpu_custom_call.1} parent=1 // pred_check
      _
    $region39: #{tpu_custom_call.1} parent=1 // pred_check_branch
      %681 = sbr.rel (0) target = $region41
    $region40: #{tpu_custom_call.1} parent=1 // pred_region
      %683 = dma.done [#allocation4], 128
    $region41: #{tpu_custom_call.1} parent=1 // pred_fallthru
      _
    %684 = vsyncpa [#allocation3], 1
    %685 = vsyncpa [#allocation6], 1
    %686 = vsyncpa [#allocation4], 1

</llo_original>
